<compile_context>
chip_gen: v5e
topology: v5e:2x2
jax: 0.10.0
libtpu: 0.0.40
codegen_flags: <defaults>
</compile_context>

<pallas_src>
import jax
import jax.numpy as jnp
from jax.experimental import pallas as pl
from jax.experimental.pallas import tpu as pltpu


def _sublane_pack(itemsize: int) -> int:
    # Rows per packed sublane tile: f32 -> 8, bf16 -> 16, int8/fp8 -> 32.
    return max(8, 32 // max(itemsize, 1))


def _round_up(x: int, m: int) -> int:
    return ((x + m - 1) // m) * m


def _pick_tile_rows(H: int, W: int, itemsize: int) -> int:
    """Choose a row-tile size that pipelines well and stays VMEM-safe."""
    pack = _sublane_pack(itemsize)
    # Per grid step: ~2 * (1 input + 3 output channels) * TH*W*itemsize
    # = 8 * TH*W*itemsize of double-buffered VMEM. 1 MiB tile budget
    # -> ~8 MiB total; large enough to amortize the ~0.35 us step overhead.
    budget = 1 * 1024 * 1024
    max_rows = max(pack, budget // max(W * itemsize, 1))
    th = min(H, max_rows, 1024)
    # Guarantee >= 2 grid steps for non-trivial arrays so both of v7x's
    # TensorCores get work under dimension_semantics=("parallel",).
    if H * W * itemsize > 1 * 1024 * 1024:
        th = min(th, _round_up(pl.cdiv(H, 2), pack))
    if th < H:
        th = max(pack, (th // pack) * pack)
    return th


def wave_geometry_freeform(rho: jax.Array, B0: float, B1: float,
                           *, tile_rows: int | None = None,
                           use_pallas: bool | None = None) -> jax.Array:
    """Compute B = stack([0, B1*rho + B0, 0]) along a new leading channel axis."""
    H, W = rho.shape
    itemsize = jnp.dtype(rho.dtype).itemsize
    b0 = float(B0)   # plain Python floats -> jaxpr literals, no captured consts
    b1 = float(B1)

    if use_pallas is None:
        # Tiny arrays: pallas_call fixed overhead exceeds total memory traffic.
        use_pallas = H * W * itemsize >= 256 * 1024

    if not use_pallas:
        plane = (b1 * rho.astype(jnp.float32) + b0).astype(rho.dtype)
        return jnp.zeros((3, H, W), dtype=rho.dtype).at[1].set(plane)

    TH = tile_rows if tile_rows is not None else _pick_tile_rows(H, W, itemsize)
    grid = (pl.cdiv(H, TH),)

    def kernel(rho_ref, b_ref):
        # Elementwise FMA in f32 (bf16-safe), cast only at the store.
        x = rho_ref[...].astype(jnp.float32)
        plane = (b1 * x + b0).astype(b_ref.dtype)
        zero = jnp.zeros_like(plane)
        b_ref[0, ...] = zero
        b_ref[1, ...] = plane
        b_ref[2, ...] = zero

    return pl.pallas_call(
        kernel,
        out_shape=jax.ShapeDtypeStruct((3, H, W), rho.dtype),
        grid=grid,
        in_specs=[pl.BlockSpec((TH, W), lambda i: (i, 0))],
        out_specs=pl.BlockSpec((3, TH, W), lambda i: (0, i, 0)),
        compiler_params=pltpu.CompilerParams(
            dimension_semantics=("parallel",),  # shard rows across v7x's 2 TCs
        ),
        cost_estimate=pl.CostEstimate(
            flops=2 * H * W,                       # one mul + one add per elem
            transcendentals=0,
            bytes_accessed=4 * H * W * itemsize,   # read rho, write 3 planes
        ),
    )(rho)


def _reference(rho: jax.Array, B0: float, B1: float) -> jax.Array:
    # Matches the kernel's numerics: FMA in f32, single cast to output dtype.
    H, W = rho.shape
    plane = (float(B1) * rho.astype(jnp.float32) + float(B0)).astype(rho.dtype)
    return jnp.zeros((3, H, W), dtype=rho.dtype).at[1].set(plane)


if __name__ == "__main__":
    # Module construction parameters (small, deterministic).
    B0 = 60e-3               # bias field [T]
    B1 = 50e-3               # field modulation amplitude [T]
    Ms = 140e3               # saturation magnetization (unused in forward)
    d = (50e-9, 50e-9)       # cell size (unused in forward)
    # TODO(synk): nn.Parameter(rho) / registered buffers are host-side module
    # state; only the forward math is expressed as a kernel.

    key = jax.random.PRNGKey(0)

    # Case 1: original small grid; force the Pallas path (single grid step).
    dim = (16, 128)
    rho = jax.random.normal(key, dim, dtype=jnp.float32) * 0.1
    B = jax.block_until_ready(
        wave_geometry_freeform(rho, B0, B1, use_pallas=True))
    assert B.shape == (3,) + dim and B.dtype == jnp.float32
    assert jnp.allclose(B, _reference(rho, B0, B1), atol=1e-7), "mismatch (case 1)"

    # Case 2: taller grid with an explicit (non-tiny) row tile to exercise the
    # multi-step pipelined grid path (2 steps, 64 KiB input blocks).
    dim2 = (128, 256)
    rho2 = jax.random.normal(jax.random.PRNGKey(1), dim2, dtype=jnp.float32) * 0.1
    B2 = jax.block_until_ready(
        wave_geometry_freeform(rho2, B0, B1, tile_rows=64, use_pallas=True))
    assert B2.shape == (3,) + dim2
    assert jnp.allclose(B2, _reference(rho2, B0, B1), atol=1e-7), "mismatch (case 2)"

    # Case 3: auto path on a tiny grid -> bypasses Pallas (launch overhead
    # dominates), still matches the reference.
    dim3 = (8, 128)
    rho3 = jax.random.normal(jax.random.PRNGKey(2), dim3, dtype=jnp.float32) * 0.1
    B3 = jax.block_until_ready(wave_geometry_freeform(rho3, B0, B1))
    assert B3.shape == (3,) + dim3
    assert jnp.allclose(B3, _reference(rho3, B0, B1), atol=1e-7), "mismatch (case 3)"

    print("KERNEL_OK")
</pallas_src>

<mosaic_0001>
module attributes {stable_mosaic.version = 11 : i64} {
  func.func @kernel(%arg0: i32, %arg1: memref<16x128xf32, #tpu.memory_space<vmem>>, %arg2: memref<3x16x128xf32, #tpu.memory_space<vmem>>) attributes {dimension_semantics = [#tpu.dimension_semantics<parallel>], iteration_bounds = array<i64: 1>, scalar_prefetch = 0 : i64, scratch_operands = 0 : i64, tpu.core_type = #tpu.core_type<tc>, window_params = [{transform_indices = @transform_0, window_bounds = array<i64: 16, 128>}, {transform_indices = @transform_1, window_bounds = array<i64: 3, 16, 128>}]} {
    %c0 = arith.constant 0 : index
    %c0_0 = arith.constant 0 : index
    %0 = vector.load %arg1[%c0, %c0_0] : memref<16x128xf32, #tpu.memory_space<vmem>>, vector<16x128xf32>
    %cst = arith.constant 5.000000e-02 : f32
    %1 = vector.broadcast %cst : f32 to vector<16x128xf32>
    %2 = arith.mulf %1, %0 : vector<16x128xf32>
    %cst_1 = arith.constant 6.000000e-02 : f32
    %3 = vector.broadcast %cst_1 : f32 to vector<16x128xf32>
    %4 = arith.addf %2, %3 : vector<16x128xf32>
    %cst_2 = arith.constant 0.000000e+00 : f32
    %5 = vector.broadcast %cst_2 : f32 to vector<16x128xf32>
    %c0_3 = arith.constant 0 : index
    %c0_4 = arith.constant 0 : index
    %c0_5 = arith.constant 0 : index
    %6 = vector.load %arg2[%c0_3, %c0_4, %c0_5] : memref<3x16x128xf32, #tpu.memory_space<vmem>>, vector<1x16x128xf32>
    %7 = vector.shape_cast %6 : vector<1x16x128xf32> to vector<16x128xf32>
    %8 = vector.shape_cast %5 : vector<16x128xf32> to vector<1x16x128xf32>
    tpu.vector_store %arg2[%c0_3, %c0_4, %c0_5], %8 {strides = array<i32>} : memref<3x16x128xf32, #tpu.memory_space<vmem>>, vector<1x16x128xf32>,
    %c1 = arith.constant 1 : index
    %c0_6 = arith.constant 0 : index
    %c0_7 = arith.constant 0 : index
    %9 = vector.load %arg2[%c1, %c0_6, %c0_7] : memref<3x16x128xf32, #tpu.memory_space<vmem>>, vector<1x16x128xf32>
    %10 = vector.shape_cast %9 : vector<1x16x128xf32> to vector<16x128xf32>
    %11 = vector.shape_cast %4 : vector<16x128xf32> to vector<1x16x128xf32>
    tpu.vector_store %arg2[%c1, %c0_6, %c0_7], %11 {strides = array<i32>} : memref<3x16x128xf32, #tpu.memory_space<vmem>>, vector<1x16x128xf32>,
    %c2 = arith.constant 2 : index
    %c0_8 = arith.constant 0 : index
    %c0_9 = arith.constant 0 : index
    %12 = vector.load %arg2[%c2, %c0_8, %c0_9] : memref<3x16x128xf32, #tpu.memory_space<vmem>>, vector<1x16x128xf32>
    %13 = vector.shape_cast %12 : vector<1x16x128xf32> to vector<16x128xf32>
    %14 = vector.shape_cast %5 : vector<16x128xf32> to vector<1x16x128xf32>
    tpu.vector_store %arg2[%c2, %c0_8, %c0_9], %14 {strides = array<i32>} : memref<3x16x128xf32, #tpu.memory_space<vmem>>, vector<1x16x128xf32>,
    return
  }
  func.func @transform_0(%arg0: i32) -> (i32, i32) {
    %c0_i32 = arith.constant 0 : i32
    %c0_i32_0 = arith.constant 0 : i32
    return %arg0, %c0_i32 : i32, i32
  }
  func.func @transform_1(%arg0: i32) -> (i32, i32, i32) {
    %c0_i32 = arith.constant 0 : i32
    %c0_i32_0 = arith.constant 0 : i32
    %c0_i32_1 = arith.constant 0 : i32
    return %c0_i32, %arg0, %c0_i32_0 : i32, i32, i32
  }
}

</mosaic_0001>

<llo_original>
// kernel: tpu_custom_call.1
$region0: #{tpu_custom_call.1}
  #allocation0 [shape = 'u32[]', space=smem, size = 0x4, offset = 0x4, fixed_abs, tag = 'smem constant byte address 0x4 - core index']
  #allocation1 [shape = 'u32[72,128]{1,0:T(1,128)}', space=vmem, size = 0x9000, scoped, tag = 'internal scratch']
  %s0 = inlined_call_operand.hbm [shape: f32[16,128], index: 0, kind: input, shape index: {}]
  %s1 = inlined_call_operand.hbm [shape: f32[3,16,128], index: 1, kind: output, shape index: {}]
  %s2 = sld [smem:[#allocation0]]
  $region18: #{tpu_custom_call.1} parent=0
    _
  %s4 = ssub.s32 1, %s2
  %s5 = scalar_select 0, %s4, %s2
  $region1: #{tpu_custom_call.1} parent=0
    #allocation2 [shape = 'u8[8192]{0}', space=vmem, size = 0x2000, scoped, tag = 'input window, operand 0, single buffered']
    #allocation3 [shape = 's32[1]{0}', space=sflag, size = 0x4, scoped, tag = 'scoped memory for tpu_custom_call.1']
    #allocation4 [shape = 's32[1]{0}', space=sflag, size = 0x4, scoped, tag = 'scoped memory for tpu_custom_call.1']
    #allocation5 [shape = 'u8[24576]{0}', space=vmem, size = 0x6000, scoped, tag = 'output window, operand 0, single buffered']
    %6 = vsyncpa [#allocation3], 0
    %7 = vsyncpa [#allocation4], 0
    // Predicated region
    $region2: #{tpu_custom_call.1} parent=1 // pred_check
      _
    $region3: #{tpu_custom_call.1} parent=1 // pred_check_branch
      %9 = sbr.rel (0) target = $region5
    $region4: #{tpu_custom_call.1} parent=1 // pred_region
      %11 = vsyncadd [#allocation3], 0
      %s12 = sshll.u32 %s0, 4
      %s13 = int_to_ptr.hbm [resolvable:$true] %s12
      %s14 = sshll.u32 [#allocation2], 4
      %s15 = int_to_ptr.vmem [resolvable:$true] %s14
      %20 = dma.hbm_to_vmem [thread:$0]  %s13, 256, %s15, [#allocation3], 128, 128, 8
    $region5: #{tpu_custom_call.1} parent=1 // pred_fallthru
      _
    // Predicated region
    $region6: #{tpu_custom_call.1} parent=1 // pred_check
      _
    $region7: #{tpu_custom_call.1} parent=1 // pred_check_branch
      %22 = sbr.rel (0) target = $region9
    $region8: #{tpu_custom_call.1} parent=1 // pred_region
      %24 = dma.done [#allocation3], 256
    $region9: #{tpu_custom_call.1} parent=1 // pred_fallthru
      _
    %v25 = vld [vmem:[#allocation2] sm:$0xff]
    %v26 = vld [vmem:[#allocation2 + $0x8] sm:$0xff]
    %v27 = vmul.f32 %v25, 0.05
    %v28 = vmul.f32 %v26, 0.05
    %v29 = vadd.f32 %v27, 0.06
    %v30 = vadd.f32 %v28, 0.06
    %31 = vst [vmem:[#allocation5] sm:$0xff] 0.0
    %32 = vst [vmem:[#allocation5 + $0x8] sm:$0xff] 0.0
    %s33 = scalar_lea.vmem [#allocation5], 16
    %34 = vst [vmem:[%s33] sm:$0xff] %v29
    %35 = vst [vmem:[%s33 + $0x8] sm:$0xff] %v30
    %s36 = scalar_lea.vmem [#allocation5], 32
    %37 = vst [vmem:[%s36] sm:$0xff] 0.0
    %38 = vst [vmem:[%s36 + $0x8] sm:$0xff] 0.0
    // Predicated region
    $region10: #{tpu_custom_call.1} parent=1 // pred_check
      _
    $region11: #{tpu_custom_call.1} parent=1 // pred_check_branch
      %40 = sbr.rel (0) target = $region13
    $region12: #{tpu_custom_call.1} parent=1 // pred_region
      %42 = vsyncadd [#allocation4], 0
      %s43 = sshll.u32 [#allocation5], 4
      %s44 = int_to_ptr.vmem [resolvable:$true] %s43
      %s45 = sshll.u32 %s1, 4
      %s46 = int_to_ptr.hbm [resolvable:$true] %s45
      %51 = dma.vmem_to_hbm [thread:$0]  %s44, 768, %s46, [#allocation4], 128, 128, 8
    $region13: #{tpu_custom_call.1} parent=1 // pred_fallthru
      _
    // Predicated region
    $region14: #{tpu_custom_call.1} parent=1 // pred_check
      _
    $region15: #{tpu_custom_call.1} parent=1 // pred_check_branch
      %53 = sbr.rel (0) target = $region17
    $region16: #{tpu_custom_call.1} parent=1 // pred_region
      %55 = dma.done [#allocation4], 768
    $region17: #{tpu_custom_call.1} parent=1 // pred_fallthru
      _
    %56 = vsyncpa [#allocation3], 1
    %57 = vsyncpa [#allocation4], 1

</llo_original>
